<compile_context>
chip_gen: v6e
topology: v6e:2x2x1
jax: 0.10.0
libtpu: 0.0.40
codegen_flags: <defaults>
</compile_context>

<pallas_src>
import functools

import jax
import jax.numpy as jnp
from jax.experimental import pallas as pl
from jax.experimental.pallas import tpu as pltpu


def _round_up(x, m):
    return (x + m - 1) // m * m


def _cdiv(a, b):
    return (a + b - 1) // b


# ----------------------------------------------------------------------------
# Chip detection (best effort; falls back to conservative v7x-style numbers).
# ----------------------------------------------------------------------------
def _chip_info():
    vmem = 64 << 20  # conservative default: v7x per-TC VMEM
    kind = ""
    try:
        vmem = int(pltpu.get_tpu_info().vmem_capacity_bytes)
    except Exception:
        pass
    try:
        kind = jax.devices()[0].device_kind.lower()
    except Exception:
        pass
    is_v5e = ("v5 lite" in kind) or ("v5e" in kind) or ("v5litepod" in kind)
    is_v6 = "v6" in kind
    is_v7 = ("v7" in kind) or ("7x" in kind)
    # v7x (and v4) have 2 TensorCores per chip sharing the grid via "parallel" axes.
    num_cores = 2 if (is_v7 or "v4" in kind) else 1
    # Batch-tile targets per generation (arithmetic intensity vs. VMEM trade-off).
    if is_v6:
        tile_b_hint = 512
    elif is_v7:
        tile_b_hint = 384
    else:
        tile_b_hint = 256
    return {
        "vmem": vmem,
        "kind": kind,
        "is_v5e": is_v5e,
        "num_cores": num_cores,
        "tile_b_hint": tile_b_hint,
    }


# ----------------------------------------------------------------------------
# Kernels
# ----------------------------------------------------------------------------
def mlp_kernel_resident(x_ref, x_w1_ref, b1_ref, w2_ref, b2_ref, o_ref):
    """Whole (padded) weights live in VMEM; grid is over batch tiles only."""
    w1_ref = x_w1_ref
    # fc1 on the MXU (bf16 x bf16 -> f32 accumulate).
    h = jnp.dot(x_ref[...], w1_ref[...], preferred_element_type=jnp.float32)
    # Bias + ReLU epilogue in b1's dtype (bf16 on v6e/v7x, f32 on v5e).
    h = jnp.maximum(h.astype(b1_ref.dtype) + b1_ref[...], 0)
    # fc2 on the MXU, f32 bias add, single lane-dense store.
    o_ref[...] = (
        jnp.dot(h.astype(w2_ref.dtype), w2_ref[...],
                preferred_element_type=jnp.float32)
        + b2_ref[...]
    ).astype(o_ref.dtype)


def mlp_kernel_streamed(x_ref, w1_ref, b1_ref, w2_ref, b2_ref, o_ref, acc_ref=None):
    """Hidden dimension streamed in slabs; f32 accumulation over the j axis.

    If acc_ref is None, the output block itself (f32, constant block index over j)
    is used as the accumulator — no scratch, no finalize copy.
    """
    acc = o_ref if acc_ref is None else acc_ref
    j = pl.program_id(1)

    @pl.when(j == 0)
    def _():
        acc[...] = jnp.zeros_like(acc)

    h = jnp.dot(x_ref[...], w1_ref[...], preferred_element_type=jnp.float32)
    h = jnp.maximum(h.astype(b1_ref.dtype) + b1_ref[...], 0)
    acc[...] += jnp.dot(h.astype(w2_ref.dtype), w2_ref[...],
                        preferred_element_type=jnp.float32)

    @pl.when(j == pl.num_programs(1) - 1)
    def _():
        if acc_ref is None:
            o_ref[...] = o_ref[...] + b2_ref[...]
        else:
            o_ref[...] = (acc_ref[...] + b2_ref[...]).astype(o_ref.dtype)


# ----------------------------------------------------------------------------
# VMEM budgeting (includes the fc1 intermediate and its cast).
# ----------------------------------------------------------------------------
def _vmem_limit(tile_b, d_in_pad, h_pad, tile_h, d_out_pad, csize, osize,
                resident, vmem_cap):
    if resident:
        need = (
            2 * tile_b * d_in_pad * csize          # x tile (double buffered)
            + 2 * d_in_pad * h_pad * csize         # W1 (budget 2x to be safe)
            + 2 * h_pad * d_out_pad * csize        # W2
            + 2 * tile_b * d_out_pad * osize       # out tile
            + tile_b * h_pad * (4 + csize)         # fc1 intermediate (f32 + cast)
            + 8 * (h_pad + d_out_pad)              # biases
        )
    else:
        need = (
            2 * tile_b * d_in_pad * csize          # x tile
            + 2 * d_in_pad * tile_h * csize        # W1 slab
            + 2 * tile_h * d_out_pad * csize       # W2 slab
            + 2 * tile_b * d_out_pad * osize       # out tile
            + tile_b * d_out_pad * 4               # f32 accumulator
            + tile_b * tile_h * (4 + csize)        # fc1 intermediate (f32 + cast)
            + 8 * (tile_h + d_out_pad)             # bias slabs
        )
    limit = int(need * 1.25) + (4 << 20)
    return int(max(16 << 20, min(limit, vmem_cap - (8 << 20))))


# ----------------------------------------------------------------------------
# One-time parameter preparation (pad + cast hoisted out of the per-call path).
# ----------------------------------------------------------------------------
def prepare_mlp_params(w1, b1, w2, b2, *, compute_dtype=jnp.bfloat16):
    """Pads lane dims to multiples of 128 and casts weights to compute_dtype ONCE.

    Weights are stored transposed vs. PyTorch: w1 [D_in, H], w2 [H, D_out].
    Zero padding keeps the math exact (padded d_in columns contribute 0 to fc1,
    padded hidden units have w1=0,b1=0 -> relu(0)=0 -> contribute 0 to fc2, padded
    d_out columns / batch rows are sliced off by the wrapper).
    """
    d_in, hidden = w1.shape
    d_out = w2.shape[1]
    assert w2.shape[0] == hidden and b1.shape == (hidden,) and b2.shape == (d_out,)

    chip = _chip_info()
    csize = jnp.dtype(compute_dtype).itemsize

    d_in_pad = _round_up(d_in, 128)
    d_out_pad = _round_up(d_out, 128)
    h_pad128 = _round_up(hidden, 128)

    # Whole-weight residency decision at the chip's target batch tile.
    tb = chip["tile_b_hint"]
    resident_need = (
        2 * (d_in_pad * h_pad128 + h_pad128 * d_out_pad) * csize  # W1 + W2
        + 2 * tb * d_in_pad * csize                               # x tile
        + 2 * tb * d_out_pad * 4                                  # out tile (f32)
        + tb * h_pad128 * (4 + csize)                             # fc1 intermediate
    )
    resident = resident_need * 1.25 + (4 << 20) <= chip["vmem"] - (8 << 20)

    if resident:
        tile_h = h_pad = h_pad128
    else:
        # Stream hidden in the largest slab that keeps the working set in budget.
        budget = int(0.5 * chip["vmem"])
        per_h = 2 * (d_in_pad + d_out_pad) * csize + tb * (4 + csize)
        tile_h = max(128, min(h_pad128, (budget // max(per_h, 1)) // 128 * 128))
        h_pad = _round_up(hidden, tile_h)

    # bf16 bias-add/ReLU epilogue on chips with a bf16 VPU; keep f32 on v5e.
    b1_dtype = jnp.float32 if chip["is_v5e"] else compute_dtype

    w1p = jnp.pad(w1, ((0, d_in_pad - d_in), (0, h_pad - hidden))).astype(compute_dtype)
    w2p = jnp.pad(w2, ((0, h_pad - hidden), (0, d_out_pad - d_out))).astype(compute_dtype)
    b1p = jnp.pad(b1, (0, h_pad - hidden)).reshape(1, h_pad).astype(b1_dtype)
    b2p = jnp.pad(b2, (0, d_out_pad - d_out)).reshape(1, d_out_pad).astype(jnp.float32)

    return {
        "w1": w1p, "b1": b1p, "w2": w2p, "b2": b2p,
        "d_in": d_in, "d_out": d_out, "hidden": hidden,
        "tile_h": int(tile_h), "resident": bool(resident),
        "chip": chip,
    }


# ----------------------------------------------------------------------------
# Pallas call
# ----------------------------------------------------------------------------
@functools.partial(
    jax.jit,
    static_argnames=("d_out", "tile_b", "n_b_tiles", "tile_h", "resident",
                     "vmem_limit"),
)
def _mlp_pallas(x, w1p, b1p, w2p, b2p, *, d_out, tile_b, n_b_tiles, tile_h,
                resident, vmem_limit):
    B, d_in = x.shape
    d_in_pad, h_pad = w1p.shape
    d_out_pad = w2p.shape[1]
    out_dtype = x.dtype
    b_pad = tile_b * n_b_tiles

    # Only x is padded/cast per call; weights were prepared once.
    xp = jnp.pad(x, ((0, b_pad - B), (0, d_in_pad - d_in))).astype(w1p.dtype)

    if resident:
        grid = (n_b_tiles,)
        in_specs = [
            pl.BlockSpec((tile_b, d_in_pad), lambda i: (i, 0)),     # x tile
            pl.BlockSpec((d_in_pad, h_pad), lambda i: (0, 0)),      # W1 (resident)
            pl.BlockSpec((1, h_pad), lambda i: (0, 0)),             # b1
            pl.BlockSpec((h_pad, d_out_pad), lambda i: (0, 0)),     # W2 (resident)
            pl.BlockSpec((1, d_out_pad), lambda i: (0, 0)),         # b2
        ]
        out_specs = pl.BlockSpec((tile_b, d_out_pad), lambda i: (i, 0))
        scratch_shapes = []
        kernel = mlp_kernel_resident
        dims = ("parallel",)
    else:
        n_h_tiles = h_pad // tile_h
        grid = (n_b_tiles, n_h_tiles)
        in_specs = [
            pl.BlockSpec((tile_b, d_in_pad), lambda i, j: (i, 0)),   # x tile
            pl.BlockSpec((d_in_pad, tile_h), lambda i, j: (0, j)),   # W1 slab
            pl.BlockSpec((1, tile_h), lambda i, j: (0, j)),          # b1 slab
            pl.BlockSpec((tile_h, d_out_pad), lambda i, j: (j, 0)),  # W2 slab
            pl.BlockSpec((1, d_out_pad), lambda i, j: (0, 0)),       # b2
        ]
        out_specs = pl.BlockSpec((tile_b, d_out_pad), lambda i, j: (i, 0))
        if jnp.dtype(out_dtype) == jnp.float32:
            scratch_shapes = []  # accumulate directly into the resident f32 output
        else:
            scratch_shapes = [pltpu.VMEM((tile_b, d_out_pad), jnp.float32)]
        kernel = mlp_kernel_streamed
        dims = ("parallel", "arbitrary")

    out_padded = pl.pallas_call(
        kernel,
        out_shape=jax.ShapeDtypeStruct((b_pad, d_out_pad), out_dtype),
        grid_spec=pltpu.PrefetchScalarGridSpec(
            num_scalar_prefetch=0,
            grid=grid,
            in_specs=in_specs,
            out_specs=out_specs,
            scratch_shapes=scratch_shapes,
        ),
        compiler_params=pltpu.CompilerParams(
            dimension_semantics=dims,
            vmem_limit_bytes=vmem_limit,
        ),
    )(xp, w1p, b1p, w2p, b2p)

    return out_padded[:B, :d_out]


def mlp_forward(x, params):
    """Fused eval-mode MLP forward: fc2(relu(fc1(x))).  x: [B, d_in] -> [B, d_out]."""
    B, d_in = x.shape
    assert d_in == params["d_in"]
    chip = params["chip"]
    d_in_pad, h_pad = params["w1"].shape
    d_out_pad = params["w2"].shape[1]
    tile_h = params["tile_h"]
    resident = params["resident"]
    csize = jnp.dtype(params["w1"].dtype).itemsize
    osize = jnp.dtype(x.dtype).itemsize

    # Batch tiling: keep b_pad close to B (low padding waste), tile_b a multiple of
    # 16, capped by the per-chip target, and at least `num_cores` tiles so the
    # "parallel" batch axis spans all TensorCores (v7x megacore).
    n_b = _cdiv(B, chip["tile_b_hint"])
    n_b = max(n_b, chip["num_cores"])
    n_b = min(n_b, max(_cdiv(B, 16), 1))
    n_b = max(n_b, 1)
    tile_b = _round_up(_cdiv(B, n_b), 16)

    vmem_limit = _vmem_limit(tile_b, d_in_pad, h_pad, tile_h, d_out_pad,
                             csize, osize, resident, chip["vmem"])

    return _mlp_pallas(
        x, params["w1"], params["b1"], params["w2"], params["b2"],
        d_out=int(params["d_out"]), tile_b=int(tile_b), n_b_tiles=int(n_b),
        tile_h=int(tile_h), resident=bool(resident), vmem_limit=int(vmem_limit),
    )


def init_params(key, input_dim, output_dim, hidden_size):
    """Deterministic init mimicking nn.Linear's U(-1/sqrt(fan_in), +1/sqrt(fan_in))."""
    k1, k2, k3, k4 = jax.random.split(key, 4)
    bound1 = 1.0 / (input_dim ** 0.5)
    bound2 = 1.0 / (hidden_size ** 0.5)
    # stored as (in, out), i.e. transpose of torch's (out, in)
    w1 = jax.random.uniform(k1, (input_dim, hidden_size), jnp.float32, -bound1, bound1)
    b1 = jax.random.uniform(k2, (hidden_size,), jnp.float32, -bound1, bound1)
    w2 = jax.random.uniform(k3, (hidden_size, output_dim), jnp.float32, -bound2, bound2)
    b2 = jax.random.uniform(k4, (output_dim,), jnp.float32, -bound2, bound2)
    return w1, b1, w2, b2


if __name__ == "__main__":
    # Small shapes consistent with the module's forward: x is [batch, input_dim].
    batch, input_dim, output_dim, hidden_size = 8, 32, 16, 512

    key = jax.random.PRNGKey(0)
    kx, kp = jax.random.split(key)
    x = jax.random.normal(kx, (batch, input_dim), jnp.float32)
    w1, b1, w2, b2 = init_params(kp, input_dim, output_dim, hidden_size)

    # One-time weight prep (pad + bf16 cast hoisted out of the per-call path).
    params = prepare_mlp_params(w1, b1, w2, b2)

    out = jax.block_until_ready(mlp_forward(x, params))

    # Reference in plain f32 JAX (eval-mode dropout == identity). Tolerance is
    # relaxed because the kernel uses bf16 matmul operands with f32 accumulation.
    ref = jnp.maximum(x @ w1 + b1, 0.0) @ w2 + b2
    assert out.shape == (batch, output_dim)
    assert jnp.allclose(out, ref, atol=2e-2, rtol=2e-2), (
        float(jnp.max(jnp.abs(out - ref)))
    )

    # Also exercise the hidden-streaming (reduction) path once at small shapes.
    params_streamed = dict(params)
    params_streamed.update(resident=False, tile_h=128)
    out2 = jax.block_until_ready(mlp_forward(x, params_streamed))
    assert jnp.allclose(out2, ref, atol=2e-2, rtol=2e-2), (
        float(jnp.max(jnp.abs(out2 - ref)))
    )

    print("KERNEL_OK")
</pallas_src>

<mosaic_0001>
module attributes {stable_mosaic.version = 11 : i64} {
  func.func @mlp_kernel_resident(%arg0: i32, %arg1: memref<16x128xbf16, #tpu.memory_space<vmem>>, %arg2: memref<128x512xbf16, #tpu.memory_space<vmem>>, %arg3: memref<1x512xbf16, #tpu.memory_space<vmem>>, %arg4: memref<512x128xbf16, #tpu.memory_space<vmem>>, %arg5: memref<1x128xf32, #tpu.memory_space<vmem>>, %arg6: memref<16x128xf32, #tpu.memory_space<vmem>>) attributes {dimension_semantics = [#tpu.dimension_semantics<parallel>], iteration_bounds = array<i64: 1>, scalar_prefetch = 0 : i64, scratch_operands = 0 : i64, tpu.core_type = #tpu.core_type<tc>, window_params = [{transform_indices = @transform_0, window_bounds = array<i64: 16, 128>}, {pipeline_mode = #tpu.pipeline_mode<synchronous>, transform_indices = @transform_1, window_bounds = array<i64: 128, 512>}, {pipeline_mode = #tpu.pipeline_mode<synchronous>, transform_indices = @transform_2, window_bounds = array<i64: 1, 512>}, {pipeline_mode = #tpu.pipeline_mode<synchronous>, transform_indices = @transform_3, window_bounds = array<i64: 512, 128>}, {pipeline_mode = #tpu.pipeline_mode<synchronous>, transform_indices = @transform_4, window_bounds = array<i64: 1, 128>}, {transform_indices = @transform_5, window_bounds = array<i64: 16, 128>}]} {
    %c0 = arith.constant 0 : index
    %c0_0 = arith.constant 0 : index
    %0 = vector.load %arg1[%c0, %c0_0] : memref<16x128xbf16, #tpu.memory_space<vmem>>, vector<16x128xbf16>
    %c0_1 = arith.constant 0 : index
    %c0_2 = arith.constant 0 : index
    %1 = vector.load %arg2[%c0_1, %c0_2] : memref<128x512xbf16, #tpu.memory_space<vmem>>, vector<128x512xbf16>
    %cst = arith.constant dense<0.000000e+00> : vector<16x512xf32>
    %2 = tpu.matmul %0, %1, %cst {dimension_numbers = #tpu.dot_dimension_numbers<[1], [0], [0], [1], [0, 0, 1, 1], [], []>} : vector<16x128xbf16>, vector<128x512xbf16>, vector<16x512xf32> -> vector<16x512xf32>
    %3 = arith.truncf %2 : vector<16x512xf32> to vector<16x512xbf16>
    %c0_3 = arith.constant 0 : index
    %c0_4 = arith.constant 0 : index
    %4 = vector.load %arg3[%c0_3, %c0_4] : memref<1x512xbf16, #tpu.memory_space<vmem>>, vector<1x512xbf16>
    %5 = vector.broadcast %4 : vector<1x512xbf16> to vector<16x512xbf16>
    %6 = arith.addf %3, %5 : vector<16x512xbf16>
    %cst_5 = arith.constant 0.000000e+00 : bf16
    %7 = vector.broadcast %cst_5 : bf16 to vector<16x512xbf16>
    %8 = arith.maximumf %6, %7 : vector<16x512xbf16>
    %c0_6 = arith.constant 0 : index
    %c0_7 = arith.constant 0 : index
    %9 = vector.load %arg4[%c0_6, %c0_7] : memref<512x128xbf16, #tpu.memory_space<vmem>>, vector<512x128xbf16>
    %cst_8 = arith.constant dense<0.000000e+00> : vector<16x128xf32>
    %10 = tpu.matmul %8, %9, %cst_8 {dimension_numbers = #tpu.dot_dimension_numbers<[1], [0], [0], [1], [0, 0, 1, 1], [], []>} : vector<16x512xbf16>, vector<512x128xbf16>, vector<16x128xf32> -> vector<16x128xf32>
    %c0_9 = arith.constant 0 : index
    %c0_10 = arith.constant 0 : index
    %11 = vector.load %arg5[%c0_9, %c0_10] : memref<1x128xf32, #tpu.memory_space<vmem>>, vector<1x128xf32>
    %12 = vector.broadcast %11 : vector<1x128xf32> to vector<16x128xf32>
    %13 = arith.addf %10, %12 : vector<16x128xf32>
    %c0_11 = arith.constant 0 : index
    %c0_12 = arith.constant 0 : index
    %14 = vector.load %arg6[%c0_11, %c0_12] : memref<16x128xf32, #tpu.memory_space<vmem>>, vector<16x128xf32>
    tpu.vector_store %arg6[%c0_11, %c0_12], %13 {strides = array<i32>} : memref<16x128xf32, #tpu.memory_space<vmem>>, vector<16x128xf32>,
    return
  }
  func.func @transform_0(%arg0: i32) -> (i32, i32) {
    %c0_i32 = arith.constant 0 : i32
    %c0_i32_0 = arith.constant 0 : i32
    return %arg0, %c0_i32 : i32, i32
  }
  func.func @transform_1(%arg0: i32) -> (i32, i32) {
    %c0_i32 = arith.constant 0 : i32
    %c0_i32_0 = arith.constant 0 : i32
    %c0_i32_1 = arith.constant 0 : i32
    return %c0_i32, %c0_i32_0 : i32, i32
  }
  func.func @transform_2(%arg0: i32) -> (i32, i32) {
    %c0_i32 = arith.constant 0 : i32
    %c0_i32_0 = arith.constant 0 : i32
    %c0_i32_1 = arith.constant 0 : i32
    return %c0_i32, %c0_i32_0 : i32, i32
  }
  func.func @transform_3(%arg0: i32) -> (i32, i32) {
    %c0_i32 = arith.constant 0 : i32
    %c0_i32_0 = arith.constant 0 : i32
    %c0_i32_1 = arith.constant 0 : i32
    return %c0_i32, %c0_i32_0 : i32, i32
  }
  func.func @transform_4(%arg0: i32) -> (i32, i32) {
    %c0_i32 = arith.constant 0 : i32
    %c0_i32_0 = arith.constant 0 : i32
    %c0_i32_1 = arith.constant 0 : i32
    return %c0_i32, %c0_i32_0 : i32, i32
  }
  func.func @transform_5(%arg0: i32) -> (i32, i32) {
    %c0_i32 = arith.constant 0 : i32
    %c0_i32_0 = arith.constant 0 : i32
    return %arg0, %c0_i32 : i32, i32
  }
}

</mosaic_0001>

<llo_original>
// kernel: _mlp_pallas.1
$region0: #{_mlp_pallas.1}
  #allocation0 [shape = 'u32[]', space=smem, size = 0x4, offset = 0x4, fixed_abs, tag = 'smem constant byte address 0x4 - core index']
  #allocation1 [shape = 'u32[144,128]{1,0:T(1,128)}', space=vmem, size = 0x12000, scoped, tag = 'internal scratch']
  %s0 = inlined_call_operand.vmem [shape: bf16[16,128], index: 0, kind: input, shape index: {}]
  %s1 = inlined_call_operand.hbm [shape: bf16[128,512], index: 1, kind: input, shape index: {}]
  %s2 = inlined_call_operand.vmem [shape: bf16[1,512], index: 2, kind: input, shape index: {}]
  %s3 = inlined_call_operand.hbm [shape: bf16[512,128], index: 3, kind: input, shape index: {}]
  %s4 = inlined_call_operand.vmem [shape: f32[1,128], index: 4, kind: input, shape index: {}]
  %s5 = inlined_call_operand.vmem [shape: f32[16,128], index: 5, kind: output, shape index: {}]
  %s6 = sld [smem:[#allocation0]]
  $region38: #{_mlp_pallas.1} parent=0
    _
  %s8 = ssub.s32 1, %s6
  %s9 = scalar_select 0, %s8, %s6
  $region1: #{_mlp_pallas.1} parent=0
    #allocation2 [shape = 'u8[131072]{0}', space=vmem, size = 0x20000, scoped, tag = 'input window, operand 1, single buffered']
    #allocation3 [shape = 's32[1]{0}', space=sflag, size = 0x4, scoped, tag = 'scoped memory for _mlp_pallas.1']
    #allocation4 [shape = 'u8[131072]{0}', space=vmem, size = 0x20000, scoped, tag = 'input window, operand 3, single buffered']
    #allocation5 [shape = 's32[1]{0}', space=sflag, size = 0x4, scoped, tag = 'scoped memory for _mlp_pallas.1']
    %10 = vsyncpa [#allocation3], 0
    %11 = vsyncpa [#allocation5], 0
    // Predicated region
    $region2: #{_mlp_pallas.1} parent=1 // pred_check
      _
    $region3: #{_mlp_pallas.1} parent=1 // pred_check_branch
      %13 = sbr.rel (0) target = $region5
    $region4: #{_mlp_pallas.1} parent=1 // pred_region
      _
    $region5: #{_mlp_pallas.1} parent=1 // pred_fallthru
      _
    // Predicated region
    $region6: #{_mlp_pallas.1} parent=1 // pred_check
      _
    $region7: #{_mlp_pallas.1} parent=1 // pred_check_branch
      %15 = sbr.rel (0) target = $region9
    $region8: #{_mlp_pallas.1} parent=1 // pred_region
      %s17 = ssub.s32 4096, 4096
      %18 = vsyncadd [#allocation3], %s17
      %s19 = sshll.u32 [#allocation2], 4
      %s20 = int_to_ptr.vmem [resolvable:$true] %s19
      %25 = dma.hbm_to_vmem [thread:$0]  %s1, 4096, %s20, [#allocation3], 256, 256, 16
    $region9: #{_mlp_pallas.1} parent=1 // pred_fallthru
      _
    // Predicated region
    $region10: #{_mlp_pallas.1} parent=1 // pred_check
      _
    $region11: #{_mlp_pallas.1} parent=1 // pred_check_branch
      %27 = sbr.rel (0) target = $region13
    $region12: #{_mlp_pallas.1} parent=1 // pred_region
      _
    $region13: #{_mlp_pallas.1} parent=1 // pred_fallthru
      _
    // Predicated region
    $region14: #{_mlp_pallas.1} parent=1 // pred_check
      _
    $region15: #{_mlp_pallas.1} parent=1 // pred_check_branch
      %29 = sbr.rel (0) target = $region17
    $region16: #{_mlp_pallas.1} parent=1 // pred_region
      %s31 = ssub.s32 4096, 4096
      %32 = vsyncadd [#allocation5], %s31
      %s33 = sshll.u32 [#allocation4], 4
      %s34 = int_to_ptr.vmem [resolvable:$true] %s33
      %39 = dma.hbm_to_vmem [thread:$0]  %s3, 4096, %s34, [#allocation5], 64, 64, 4
    $region17: #{_mlp_pallas.1} parent=1 // pred_fallthru
      _
    // Predicated region
    $region18: #{_mlp_pallas.1} parent=1 // pred_check
      _
    $region19: #{_mlp_pallas.1} parent=1 // pred_check_branch
      %41 = sbr.rel (0) target = $region21
    $region20: #{_mlp_pallas.1} parent=1 // pred_region
      _
    $region21: #{_mlp_pallas.1} parent=1 // pred_fallthru
      _
    // Predicated region
    $region22: #{_mlp_pallas.1} parent=1 // pred_check
      _
    $region23: #{_mlp_pallas.1} parent=1 // pred_check_branch
      %43 = sbr.rel (0) target = $region25
    $region24: #{_mlp_pallas.1} parent=1 // pred_region
      %44 = dma.done [#allocation3], 4096
    $region25: #{_mlp_pallas.1} parent=1 // pred_fallthru
      _
    // Predicated region
    $region26: #{_mlp_pallas.1} parent=1 // pred_check
      _
    $region27: #{_mlp_pallas.1} parent=1 // pred_check_branch
      %46 = sbr.rel (0) target = $region29
    $region28: #{_mlp_pallas.1} parent=1 // pred_region
      %47 = dma.done [#allocation5], 4096
    $region29: #{_mlp_pallas.1} parent=1 // pred_fallthru
      _
    %v49 = vld [vmem:[%s0] sm:$0xf]
    %v50 = vld [vmem:[%s0 + $0x4] sm:$0xf]
    %v51 = vld [vmem:[#allocation2] sm:$0xff]
    %v52 = vld [vmem:[#allocation2 + $0x8] sm:$0xff]
    %v53 = vld [vmem:[#allocation2 + $0x10] sm:$0xff]
    %v54 = vld [vmem:[#allocation2 + $0x18] sm:$0xff]
    %v55 = vld [vmem:[#allocation2 + $0x20] sm:$0xff]
    %v56 = vld [vmem:[#allocation2 + $0x28] sm:$0xff]
    %v57 = vld [vmem:[#allocation2 + $0x30] sm:$0xff]
    %v58 = vld [vmem:[#allocation2 + $0x38] sm:$0xff]
    %v59 = vld [vmem:[#allocation2 + $0x40] sm:$0xff]
    %v60 = vld [vmem:[#allocation2 + $0x48] sm:$0xff]
    %v61 = vld [vmem:[#allocation2 + $0x50] sm:$0xff]
    %v62 = vld [vmem:[#allocation2 + $0x58] sm:$0xff]
    %v63 = vld [vmem:[#allocation2 + $0x60] sm:$0xff]
    %v64 = vld [vmem:[#allocation2 + $0x68] sm:$0xff]
    %v65 = vld [vmem:[#allocation2 + $0x70] sm:$0xff]
    %v66 = vld [vmem:[#allocation2 + $0x78] sm:$0xff]
    %v67 = vld [vmem:[#allocation2 + $0x80] sm:$0xff]
    %v68 = vld [vmem:[#allocation2 + $0x88] sm:$0xff]
    %v69 = vld [vmem:[#allocation2 + $0x90] sm:$0xff]
    %v70 = vld [vmem:[#allocation2 + $0x98] sm:$0xff]
    %v71 = vld [vmem:[#allocation2 + $0xa0] sm:$0xff]
    %v72 = vld [vmem:[#allocation2 + $0xa8] sm:$0xff]
    %v73 = vld [vmem:[#allocation2 + $0xb0] sm:$0xff]
    %v74 = vld [vmem:[#allocation2 + $0xb8] sm:$0xff]
    %v75 = vld [vmem:[#allocation2 + $0xc0] sm:$0xff]
    %v76 = vld [vmem:[#allocation2 + $0xc8] sm:$0xff]
    %v77 = vld [vmem:[#allocation2 + $0xd0] sm:$0xff]
    %v78 = vld [vmem:[#allocation2 + $0xd8] sm:$0xff]
    %v79 = vld [vmem:[#allocation2 + $0xe0] sm:$0xff]
    %v80 = vld [vmem:[#allocation2 + $0xe8] sm:$0xff]
    %v81 = vld [vmem:[#allocation2 + $0xf0] sm:$0xff]
    %v82 = vld [vmem:[#allocation2 + $0xf8] sm:$0xff]
    %v85 = vunpack.c.l.b16 %v49
    %v86 = vunpack.c.l.b16 %v50
    %v87 = vpack.c.b16 %v86, %v85
    %v121 = vunpack.c.l.b16 %v51
    %v122 = vunpack.c.h.b16 %v51
    %v123 = vunpack.c.l.b16 %v52
    %v124 = vunpack.c.h.b16 %v52
    %v125 = vunpack.c.l.b16 %v53
    %v126 = vunpack.c.h.b16 %v53
    %v127 = vunpack.c.l.b16 %v54
    %v128 = vunpack.c.h.b16 %v54
    %v129 = vunpack.c.l.b16 %v55
    %v130 = vunpack.c.h.b16 %v55
    %v131 = vunpack.c.l.b16 %v56
    %v132 = vunpack.c.h.b16 %v56
    %v133 = vunpack.c.l.b16 %v57
    %v134 = vunpack.c.h.b16 %v57
    %v135 = vunpack.c.l.b16 %v58
    %v136 = vunpack.c.h.b16 %v58
    %v137 = vunpack.c.l.b16 %v59
    %v138 = vunpack.c.h.b16 %v59
    %v139 = vunpack.c.l.b16 %v60
    %v140 = vunpack.c.h.b16 %v60
    %v141 = vunpack.c.l.b16 %v61
    %v142 = vunpack.c.h.b16 %v61
    %v143 = vunpack.c.l.b16 %v62
    %v144 = vunpack.c.h.b16 %v62
    %v145 = vunpack.c.l.b16 %v63
    %v146 = vunpack.c.h.b16 %v63
    %v147 = vunpack.c.l.b16 %v64
    %v148 = vunpack.c.h.b16 %v64
    %v149 = vunpack.c.l.b16 %v65
    %v150 = vunpack.c.h.b16 %v65
    %v151 = vunpack.c.l.b16 %v66
    %v152 = vunpack.c.h.b16 %v66
    %v153 = vunpack.c.l.b16 %v67
    %v154 = vunpack.c.h.b16 %v67
    %v155 = vunpack.c.l.b16 %v68
    %v156 = vunpack.c.h.b16 %v68
    %v157 = vunpack.c.l.b16 %v69
    %v158 = vunpack.c.h.b16 %v69
    %v159 = vunpack.c.l.b16 %v70
    %v160 = vunpack.c.h.b16 %v70
    %v161 = vunpack.c.l.b16 %v71
    %v162 = vunpack.c.h.b16 %v71
    %v163 = vunpack.c.l.b16 %v72
    %v164 = vunpack.c.h.b16 %v72
    %v165 = vunpack.c.l.b16 %v73
    %v166 = vunpack.c.h.b16 %v73
    %v167 = vunpack.c.l.b16 %v74
    %v168 = vunpack.c.h.b16 %v74
    %v169 = vunpack.c.l.b16 %v75
    %v170 = vunpack.c.h.b16 %v75
    %v171 = vunpack.c.l.b16 %v76
    %v172 = vunpack.c.h.b16 %v76
    %v173 = vunpack.c.l.b16 %v77
    %v174 = vunpack.c.h.b16 %v77
    %v175 = vunpack.c.l.b16 %v78
    %v176 = vunpack.c.h.b16 %v78
    %v177 = vunpack.c.l.b16 %v79
    %v178 = vunpack.c.h.b16 %v79
    %v179 = vunpack.c.l.b16 %v80
    %v180 = vunpack.c.h.b16 %v80
    %v181 = vunpack.c.l.b16 %v81
    %v182 = vunpack.c.h.b16 %v81
    %v183 = vunpack.c.l.b16 %v82
    %v184 = vunpack.c.h.b16 %v82
    %v185 = vpack.c.b16 %v125, %v121
    %v186 = vpack.c.b16 %v126, %v122
    %v187 = vpack.c.b16 %v127, %v123
    %v188 = vpack.c.b16 %v128, %v124
    %v189 = vpack.c.b16 %v133, %v129
    %v190 = vpack.c.b16 %v134, %v130
    %v191 = vpack.c.b16 %v135, %v131
    %v192 = vpack.c.b16 %v136, %v132
    %v193 = vpack.c.b16 %v141, %v137
    %v194 = vpack.c.b16 %v142, %v138
    %v195 = vpack.c.b16 %v143, %v139
    %v196 = vpack.c.b16 %v144, %v140
    %v197 = vpack.c.b16 %v149, %v145
    %v198 = vpack.c.b16 %v150, %v146
    %v199 = vpack.c.b16 %v151, %v147
    %v200 = vpack.c.b16 %v152, %v148
    %v201 = vpack.c.b16 %v157, %v153
    %v202 = vpack.c.b16 %v158, %v154
    %v203 = vpack.c.b16 %v159, %v155
    %v204 = vpack.c.b16 %v160, %v156
    %v205 = vpack.c.b16 %v165, %v161
    %v206 = vpack.c.b16 %v166, %v162
    %v207 = vpack.c.b16 %v167, %v163
    %v208 = vpack.c.b16 %v168, %v164
    %v209 = vpack.c.b16 %v173, %v169
    %v210 = vpack.c.b16 %v174, %v170
    %v211 = vpack.c.b16 %v175, %v171
    %v212 = vpack.c.b16 %v176, %v172
    %v213 = vpack.c.b16 %v181, %v177
    %v214 = vpack.c.b16 %v182, %v178
    %v215 = vpack.c.b16 %v183, %v179
    %v216 = vpack.c.b16 %v184, %v180
    %249 = vmatprep.subr.bf16.mxu0 %v214
    %250 = vmatpush1.bf16.msra.mxu0 %v213
    %251 = vmatprep.subr.bf16.mxu0 %v210
    %252 = vmatpush1.bf16.msra.mxu0 %v209
    %253 = vmatprep.subr.bf16.mxu0 %v206
    %254 = vmatpush1.bf16.msra.mxu0 %v205
    %255 = vmatprep.subr.bf16.mxu0 %v202
    %256 = vmatpush1.bf16.msra.mxu0 %v201
    %257 = vmatprep.subr.bf16.mxu0 %v198
    %258 = vmatpush1.bf16.msra.mxu0 %v197
    %259 = vmatprep.subr.bf16.mxu0 %v194
    %260 = vmatpush1.bf16.msra.mxu0 %v193
    %261 = vmatprep.subr.bf16.mxu0 %v190
    %262 = vmatpush1.bf16.msra.mxu0 %v189
    %263 = vmatprep.subr.bf16.mxu0 %v186
    %264 = vmatpush1.bf16.msra.mxu0 %v185
    %265 = vmatprep.subr.bf16.mxu0 0
    %266 = vmatpush2.bf16.msra.mxu0 0
    %267 = vmatprep.subr.bf16.mxu0 0
    %268 = vmatpush2.bf16.msra.mxu0 0
    %269 = vmatprep.subr.bf16.mxu0 0
    %270 = vmatpush2.bf16.msra.mxu0 0
    %271 = vmatprep.subr.bf16.mxu0 0
    %272 = vmatpush2.bf16.msra.mxu0 0
    %273 = vmatprep.subr.bf16.mxu0 0
    %274 = vmatpush2.bf16.msra.mxu0 0
    %275 = vmatprep.subr.bf16.mxu0 0
    %276 = vmatpush2.bf16.msra.mxu0 0
    %277 = vmatprep.subr.bf16.mxu0 0
    %278 = vmatpush2.bf16.msra.mxu0 0
    %279 = vmatprep.subr.bf16.mxu0 0
    %280 = vmatpush2.bf16.msra.mxu0 0
    %281 = vmatprep.mubr.bf16.mxu0 0
    %282 = vmatmul.mubr.bf16.gmra.mxu0 %v87
    %v283 = vpop.f32.mrf.mxu0
    %v284 = vadd.f32 0.0, %v283
    %v285 = vpop.f32.mrf.mxu0
    %v286 = vadd.f32 0.0, %v285
    %v287 = vpop.f32.mrf.mxu0
    %v288 = vadd.f32 0.0, %v287
    %v289 = vpop.f32.mrf.mxu0
    %v290 = vadd.f32 0.0, %v289
    %291 = vdwg.mxu0
    %292 = vmatprep.subr.bf16.mxu0 %v216
    %293 = vmatpush1.bf16.msra.mxu0 %v215
    %294 = vmatprep.subr.bf16.mxu0 %v212
    %295 = vmatpush1.bf16.msra.mxu0 %v211
    %296 = vmatprep.subr.bf16.mxu0 %v208
    %297 = vmatpush1.bf16.msra.mxu0 %v207
    %298 = vmatprep.subr.bf16.mxu0 %v204
    %299 = vmatpush1.bf16.msra.mxu0 %v203
    %300 = vmatprep.subr.bf16.mxu0 %v200
    %301 = vmatpush1.bf16.msra.mxu0 %v199
    %302 = vmatprep.subr.bf16.mxu0 %v196
    %303 = vmatpush1.bf16.msra.mxu0 %v195
    %304 = vmatprep.subr.bf16.mxu0 %v192
    %305 = vmatpush1.bf16.msra.mxu0 %v191
    %306 = vmatprep.subr.bf16.mxu0 %v188
    %307 = vmatpush1.bf16.msra.mxu0 %v187
    %308 = vmatprep.subr.bf16.mxu0 0
    %309 = vmatpush2.bf16.msra.mxu0 0
    %310 = vmatprep.subr.bf16.mxu0 0
    %311 = vmatpush2.bf16.msra.mxu0 0
    %312 = vmatprep.subr.bf16.mxu0 0
    %313 = vmatpush2.bf16.msra.mxu0 0
    %314 = vmatprep.subr.bf16.mxu0 0
    %315 = vmatpush2.bf16.msra.mxu0 0
    %316 = vmatprep.subr.bf16.mxu0 0
    %317 = vmatpush2.bf16.msra.mxu0 0
    %318 = vmatprep.subr.bf16.mxu0 0
    %319 = vmatpush2.bf16.msra.mxu0 0
    %320 = vmatprep.subr.bf16.mxu0 0
    %321 = vmatpush2.bf16.msra.mxu0 0
    %322 = vmatprep.subr.bf16.mxu0 0
    %323 = vmatpush2.bf16.msra.mxu0 0
    %324 = vmatprep.mubr.bf16.mxu0 0
    %325 = vmatmul.mubr.bf16.gmra.mxu0 %v87
    %v326 = vpop.f32.mrf.mxu0
    %v327 = vadd.f32 0.0, %v326
    %v328 = vpop.f32.mrf.mxu0
    %v329 = vadd.f32 0.0, %v328
    %v330 = vpop.f32.mrf.mxu0
    %v331 = vadd.f32 0.0, %v330
    %v332 = vpop.f32.mrf.mxu0
    %v333 = vadd.f32 0.0, %v332
    %334 = vdwg.mxu0
    %v335 = vpack.c.bf16 %v288, %v284
    %v336 = vpack.c.bf16 %v290, %v286
    %v337 = vpack.c.bf16 %v331, %v327
    %v338 = vpack.c.bf16 %v333, %v329
    %v339 = vld [vmem:[%s2] sm:$0xf]
    %v342 = vunpack.c.l.s4 1966171168
    %v343 = vunpack.c.0.s8 %v342
    %v344 = vlaneseq
    %v345 = vshrl.u32 %v344, 7
    %v346 = vsub.s32 %v343, %v345
    %v347 = vrot.slane %v339, %v346
    %v348 = vcombine.high %v347, %v347
    %v350 = vunpack.c.l.s4 1966171168
    %v351 = vunpack.c.0.s8 %v350
    %v352 = vlaneseq
    %v353 = vshrl.u32 %v352, 7
    %v354 = vsub.s32 %v351, %v353
    %v355 = vrot.slane %v347, %v354
    %v357 = vunpack.c.l.s4 1966171168
    %v358 = vunpack.c.0.s8 %v357
    %v359 = vlaneseq
    %v360 = vshrl.u32 %v359, 7
    %v361 = vsub.s32 %v358, %v360
    %v362 = vrot.slane %v348, %v361
    %v363 = vcombine.high %v355, %v355
    %v364 = vcombine.high %v362, %v362
    %v366 = vpack.i.b16 %v355, %v355
    %v368 = vlaneseq
    %v369 = vshrl.u32 %v368, 7
    %v370 = vsub.s32 0, %v369
    %v371 = vrot.slane %v366, %v370
    %v373 = vpack.i.b16 %v362, %v362
    %v375 = vlaneseq
    %v376 = vshrl.u32 %v375, 7
    %v377 = vsub.s32 0, %v376
    %v378 = vrot.slane %v373, %v377
    %v380 = vpack.i.b16 %v363, %v363
    %v382 = vlaneseq
    %v383 = vshrl.u32 %v382, 7
    %v384 = vsub.s32 0, %v383
    %v385 = vrot.slane %v380, %v384
    %v387 = vpack.i.b16 %v364, %v364
    %v389 = vlaneseq
    %v390 = vshrl.u32 %v389, 7
    %v391 = vsub.s32 0, %v390
    %v392 = vrot.slane %v387, %v391
    %v393 = vadd.bf16 %v335, %v371
    %v394 = vadd.bf16 %v336, %v378
    %v395 = vadd.bf16 %v337, %v385
    %v396 = vadd.bf16 %v338, %v392
    %v397 = vmax.bf16 %v393, 0
    %v398 = vmax.bf16 %v394, 0
    %v399 = vmax.bf16 %v395, 0
    %v400 = vmax.bf16 %v396, 0
    %v401 = vld [vmem:[#allocation4] sm:$0xf]
    %v402 = vld [vmem:[#allocation4 + $0x4] sm:$0xf]
    %v403 = vld [vmem:[#allocation4 + $0x8] sm:$0xf]
    %v404 = vld [vmem:[#allocation4 + $0xc] sm:$0xf]
    %v405 = vld [vmem:[#allocation4 + $0x10] sm:$0xf]
    %v406 = vld [vmem:[#allocation4 + $0x14] sm:$0xf]
    %v407 = vld [vmem:[#allocation4 + $0x18] sm:$0xf]
    %v408 = vld [vmem:[#allocation4 + $0x1c] sm:$0xf]
    %v409 = vld [vmem:[#allocation4 + $0x20] sm:$0xf]
    %v410 = vld [vmem:[#allocation4 + $0x24] sm:$0xf]
    %v411 = vld [vmem:[#allocation4 + $0x28] sm:$0xf]
    %v412 = vld [vmem:[#allocation4 + $0x2c] sm:$0xf]
    %v413 = vld [vmem:[#allocation4 + $0x30] sm:$0xf]
    %v414 = vld [vmem:[#allocation4 + $0x34] sm:$0xf]
    %v415 = vld [vmem:[#allocation4 + $0x38] sm:$0xf]
    %v416 = vld [vmem:[#allocation4 + $0x3c] sm:$0xf]
    %v417 = vld [vmem:[#allocation4 + $0x40] sm:$0xf]
    %v418 = vld [vmem:[#allocation4 + $0x44] sm:$0xf]
    %v419 = vld [vmem:[#allocation4 + $0x48] sm:$0xf]
    %v420 = vld [vmem:[#allocation4 + $0x4c] sm:$0xf]
    %v421 = vld [vmem:[#allocation4 + $0x50] sm:$0xf]
    %v422 = vld [vmem:[#allocation4 + $0x54] sm:$0xf]
    %v423 = vld [vmem:[#allocation4 + $0x58] sm:$0xf]
    %v424 = vld [vmem:[#allocation4 + $0x5c] sm:$0xf]
    %v425 = vld [vmem:[#allocation4 + $0x60] sm:$0xf]
    %v426 = vld [vmem:[#allocation4 + $0x64] sm:$0xf]
    %v427 = vld [vmem:[#allocation4 + $0x68] sm:$0xf]
    %v428 = vld [vmem:[#allocation4 + $0x6c] sm:$0xf]
    %v429 = vld [vmem:[#allocation4 + $0x70] sm:$0xf]
    %v430 = vld [vmem:[#allocation4 + $0x74] sm:$0xf]
    %v431 = vld [vmem:[#allocation4 + $0x78] sm:$0xf]
    %v432 = vld [vmem:[#allocation4 + $0x7c] sm:$0xf]
    %v433 = vld [vmem:[#allocation4 + $0x80] sm:$0xf]
    %v434 = vld [vmem:[#allocation4 + $0x84] sm:$0xf]
    %v435 = vld [vmem:[#allocation4 + $0x88] sm:$0xf]
    %v436 = vld [vmem:[#allocation4 + $0x8c] sm:$0xf]
    %v437 = vld [vmem:[#allocation4 + $0x90] sm:$0xf]
    %v438 = vld [vmem:[#allocation4 + $0x94] sm:$0xf]
    %v439 = vld [vmem:[#allocation4 + $0x98] sm:$0xf]
    %v440 = vld [vmem:[#allocation4 + $0x9c] sm:$0xf]
    %v441 = vld [vmem:[#allocation4 + $0xa0] sm:$0xf]
    %v442 = vld [vmem:[#allocation4 + $0xa4] sm:$0xf]
    %v443 = vld [vmem:[#allocation4 + $0xa8] sm:$0xf]
    %v444 = vld [vmem:[#allocation4 + $0xac] sm:$0xf]
    %v445 = vld [vmem:[#allocation4 + $0xb0] sm:$0xf]
    %v446 = vld [vmem:[#allocation4 + $0xb4] sm:$0xf]
    %v447 = vld [vmem:[#allocation4 + $0xb8] sm:$0xf]
    %v448 = vld [vmem:[#allocation4 + $0xbc] sm:$0xf]
    %v449 = vld [vmem:[#allocation4 + $0xc0] sm:$0xf]
    %v450 = vld [vmem:[#allocation4 + $0xc4] sm:$0xf]
    %v451 = vld [vmem:[#allocation4 + $0xc8] sm:$0xf]
    %v452 = vld [vmem:[#allocation4 + $0xcc] sm:$0xf]
    %v453 = vld [vmem:[#allocation4 + $0xd0] sm:$0xf]
    %v454 = vld [vmem:[#allocation4 + $0xd4] sm:$0xf]
    %v455 = vld [vmem:[#allocation4 + $0xd8] sm:$0xf]
    %v456 = vld [vmem:[#allocation4 + $0xdc] sm:$0xf]
    %v457 = vld [vmem:[#allocation4 + $0xe0] sm:$0xf]
    %v458 = vld [vmem:[#allocation4 + $0xe4] sm:$0xf]
    %v459 = vld [vmem:[#allocation4 + $0xe8] sm:$0xf]
    %v460 = vld [vmem:[#allocation4 + $0xec] sm:$0xf]
    %v461 = vld [vmem:[#allocation4 + $0xf0] sm:$0xf]
    %v462 = vld [vmem:[#allocation4 + $0xf4] sm:$0xf]
    %v463 = vld [vmem:[#allocation4 + $0xf8] sm:$0xf]
    %v464 = vld [vmem:[#allocation4 + $0xfc] sm:$0xf]
    %v465 = vld [vmem:[%s4] sm:$0x1]
    %v467 = vlaneseq
    %v468 = vshrl.u32 %v467, 7
    %v469 = vsub.s32 0, %v468
    %v470 = vrot.slane %v465, %v469
    %v536 = vunpack.c.l.b16 %v401
    %v537 = vunpack.c.l.b16 %v402
    %v538 = vunpack.c.l.b16 %v403
    %v539 = vunpack.c.l.b16 %v404
    %v540 = vunpack.c.l.b16 %v405
    %v541 = vunpack.c.l.b16 %v406
    %v542 = vunpack.c.l.b16 %v407
    %v543 = vunpack.c.l.b16 %v408
    %v544 = vunpack.c.l.b16 %v409
    %v545 = vunpack.c.l.b16 %v410
    %v546 = vunpack.c.l.b16 %v411
    %v547 = vunpack.c.l.b16 %v412
    %v548 = vunpack.c.l.b16 %v413
    %v549 = vunpack.c.l.b16 %v414
    %v550 = vunpack.c.l.b16 %v415
    %v551 = vunpack.c.l.b16 %v416
    %v552 = vunpack.c.l.b16 %v417
    %v553 = vunpack.c.l.b16 %v418
    %v554 = vunpack.c.l.b16 %v419
    %v555 = vunpack.c.l.b16 %v420
    %v556 = vunpack.c.l.b16 %v421
    %v557 = vunpack.c.l.b16 %v422
    %v558 = vunpack.c.l.b16 %v423
    %v559 = vunpack.c.l.b16 %v424
    %v560 = vunpack.c.l.b16 %v425
    %v561 = vunpack.c.l.b16 %v426
    %v562 = vunpack.c.l.b16 %v427
    %v563 = vunpack.c.l.b16 %v428
    %v564 = vunpack.c.l.b16 %v429
    %v565 = vunpack.c.l.b16 %v430
    %v566 = vunpack.c.l.b16 %v431
    %v567 = vunpack.c.l.b16 %v432
    %v568 = vunpack.c.l.b16 %v433
    %v569 = vunpack.c.l.b16 %v434
    %v570 = vunpack.c.l.b16 %v435
    %v571 = vunpack.c.l.b16 %v436
    %v572 = vunpack.c.l.b16 %v437
    %v573 = vunpack.c.l.b16 %v438
    %v574 = vunpack.c.l.b16 %v439
    %v575 = vunpack.c.l.b16 %v440
    %v576 = vunpack.c.l.b16 %v441
    %v577 = vunpack.c.l.b16 %v442
    %v578 = vunpack.c.l.b16 %v443
    %v579 = vunpack.c.l.b16 %v444
    %v580 = vunpack.c.l.b16 %v445
    %v581 = vunpack.c.l.b16 %v446
    %v582 = vunpack.c.l.b16 %v447
    %v583 = vunpack.c.l.b16 %v448
    %v584 = vunpack.c.l.b16 %v449
    %v585 = vunpack.c.l.b16 %v450
    %v586 = vunpack.c.l.b16 %v451
    %v587 = vunpack.c.l.b16 %v452
    %v588 = vunpack.c.l.b16 %v453
    %v589 = vunpack.c.l.b16 %v454
    %v590 = vunpack.c.l.b16 %v455
    %v591 = vunpack.c.l.b16 %v456
    %v592 = vunpack.c.l.b16 %v457
    %v593 = vunpack.c.l.b16 %v458
    %v594 = vunpack.c.l.b16 %v459
    %v595 = vunpack.c.l.b16 %v460
    %v596 = vunpack.c.l.b16 %v461
    %v597 = vunpack.c.l.b16 %v462
    %v598 = vunpack.c.l.b16 %v463
    %v599 = vunpack.c.l.b16 %v464
    %v600 = vpack.c.b16 %v537, %v536
    %v601 = vpack.c.b16 %v539, %v538
    %v602 = vpack.c.b16 %v541, %v540
    %v603 = vpack.c.b16 %v543, %v542
    %v604 = vpack.c.b16 %v545, %v544
    %v605 = vpack.c.b16 %v547, %v546
    %v606 = vpack.c.b16 %v549, %v548
    %v607 = vpack.c.b16 %v551, %v550
    %v608 = vpack.c.b16 %v553, %v552
    %v609 = vpack.c.b16 %v555, %v554
    %v610 = vpack.c.b16 %v557, %v556
    %v611 = vpack.c.b16 %v559, %v558
    %v612 = vpack.c.b16 %v561, %v560
    %v613 = vpack.c.b16 %v563, %v562
    %v614 = vpack.c.b16 %v565, %v564
    %v615 = vpack.c.b16 %v567, %v566
    %v616 = vpack.c.b16 %v569, %v568
    %v617 = vpack.c.b16 %v571, %v570
    %v618 = vpack.c.b16 %v573, %v572
    %v619 = vpack.c.b16 %v575, %v574
    %v620 = vpack.c.b16 %v577, %v576
    %v621 = vpack.c.b16 %v579, %v578
    %v622 = vpack.c.b16 %v581, %v580
    %v623 = vpack.c.b16 %v583, %v582
    %v624 = vpack.c.b16 %v585, %v584
    %v625 = vpack.c.b16 %v587, %v586
    %v626 = vpack.c.b16 %v589, %v588
    %v627 = vpack.c.b16 %v591, %v590
    %v628 = vpack.c.b16 %v593, %v592
    %v629 = vpack.c.b16 %v595, %v594
    %v630 = vpack.c.b16 %v597, %v596
    %v631 = vpack.c.b16 %v599, %v598
    %664 = vmatprep.subr.bf16.mxu0 0
    %665 = vmatpush1.bf16.msra.mxu0 %v607
    %666 = vmatprep.subr.bf16.mxu0 0
    %667 = vmatpush1.bf16.msra.mxu0 %v606
    %668 = vmatprep.subr.bf16.mxu0 0
    %669 = vmatpush1.bf16.msra.mxu0 %v605
    %670 = vmatprep.subr.bf16.mxu0 0
    %671 = vmatpush1.bf16.msra.mxu0 %v604
    %672 = vmatprep.subr.bf16.mxu0 0
    %673 = vmatpush1.bf16.msra.mxu0 %v603
    %674 = vmatprep.subr.bf16.mxu0 0
    %675 = vmatpush1.bf16.msra.mxu0 %v602
    %676 = vmatprep.subr.bf16.mxu0 0
    %677 = vmatpush1.bf16.msra.mxu0 %v601
    %678 = vmatprep.subr.bf16.mxu0 0
    %679 = vmatpush1.bf16.msra.mxu0 %v600
    %680 = vmatprep.subr.bf16.mxu0 0
    %681 = vmatpush2.bf16.msra.mxu0 %v615
    %682 = vmatprep.subr.bf16.mxu0 0
    %683 = vmatpush2.bf16.msra.mxu0 %v614
    %684 = vmatprep.subr.bf16.mxu0 0
    %685 = vmatpush2.bf16.msra.mxu0 %v613
    %686 = vmatprep.subr.bf16.mxu0 0
    %687 = vmatpush2.bf16.msra.mxu0 %v612
    %688 = vmatprep.subr.bf16.mxu0 0
    %689 = vmatpush2.bf16.msra.mxu0 %v611
    %690 = vmatprep.subr.bf16.mxu0 0
    %691 = vmatpush2.bf16.msra.mxu0 %v610
    %692 = vmatprep.subr.bf16.mxu0 0
    %693 = vmatpush2.bf16.msra.mxu0 %v609
    %694 = vmatprep.subr.bf16.mxu0 0
    %695 = vmatpush2.bf16.msra.mxu0 %v608
    %696 = vmatprep.mubr.bf16.mxu0 %v398
    %697 = vmatmul.mubr.bf16.gmra.mxu0 %v397
    %v698 = vpop.f32.mrf.mxu0
    %v699 = vadd.f32 %v470, %v698
    %v700 = vpop.f32.mrf.mxu0
    %v701 = vpop.f32.mrf.mxu0
    %v702 = vadd.f32 %v470, %v701
    %v703 = vpop.f32.mrf.mxu0
    %704 = vdwg.mxu0
    %705 = vmatprep.subr.bf16.mxu0 0
    %706 = vmatpush1.bf16.msra.mxu0 %v623
    %707 = vmatprep.subr.bf16.mxu0 0
    %708 = vmatpush1.bf16.msra.mxu0 %v622
    %709 = vmatprep.subr.bf16.mxu0 0
    %710 = vmatpush1.bf16.msra.mxu0 %v621
    %711 = vmatprep.subr.bf16.mxu0 0
    %712 = vmatpush1.bf16.msra.mxu0 %v620
    %713 = vmatprep.subr.bf16.mxu0 0
    %714 = vmatpush1.bf16.msra.mxu0 %v619
    %715 = vmatprep.subr.bf16.mxu0 0
    %716 = vmatpush1.bf16.msra.mxu0 %v618
    %717 = vmatprep.subr.bf16.mxu0 0
    %718 = vmatpush1.bf16.msra.mxu0 %v617
    %719 = vmatprep.subr.bf16.mxu0 0
    %720 = vmatpush1.bf16.msra.mxu0 %v616
    %721 = vmatprep.subr.bf16.mxu0 0
    %722 = vmatpush2.bf16.msra.mxu0 %v631
    %723 = vmatprep.subr.bf16.mxu0 0
    %724 = vmatpush2.bf16.msra.mxu0 %v630
    %725 = vmatprep.subr.bf16.mxu0 0
    %726 = vmatpush2.bf16.msra.mxu0 %v629
    %727 = vmatprep.subr.bf16.mxu0 0
    %728 = vmatpush2.bf16.msra.mxu0 %v628
    %729 = vmatprep.subr.bf16.mxu0 0
    %730 = vmatpush2.bf16.msra.mxu0 %v627
    %731 = vmatprep.subr.bf16.mxu0 0
    %732 = vmatpush2.bf16.msra.mxu0 %v626
    %733 = vmatprep.subr.bf16.mxu0 0
    %734 = vmatpush2.bf16.msra.mxu0 %v625
    %735 = vmatprep.subr.bf16.mxu0 0
    %736 = vmatpush2.bf16.msra.mxu0 %v624
    %737 = vmatprep.mubr.bf16.mxu0 %v400
    %738 = vmatmul.mubr.bf16.gmra.mxu0 %v399
    %v739 = vpop.f32.mrf.mxu0
    %v740 = vadd.f32 %v699, %v739
    %v741 = vpop.f32.mrf.mxu0
    %v742 = vpop.f32.mrf.mxu0
    %v743 = vadd.f32 %v702, %v742
    %v744 = vpop.f32.mrf.mxu0
    %745 = vdwg.mxu0
    %746 = vst [vmem:[%s5] sm:$0xff] %v740
    %747 = vst [vmem:[%s5 + $0x8] sm:$0xff] %v743
    // Predicated region
    $region30: #{_mlp_pallas.1} parent=1 // pred_check
      _
    $region31: #{_mlp_pallas.1} parent=1 // pred_check_branch
      %749 = sbr.rel (0) target = $region33
    $region32: #{_mlp_pallas.1} parent=1 // pred_region
      _
    $region33: #{_mlp_pallas.1} parent=1 // pred_fallthru
      _
    // Predicated region
    $region34: #{_mlp_pallas.1} parent=1 // pred_check
      _
    $region35: #{_mlp_pallas.1} parent=1 // pred_check_branch
      %751 = sbr.rel (0) target = $region37
    $region36: #{_mlp_pallas.1} parent=1 // pred_region
      _
    $region37: #{_mlp_pallas.1} parent=1 // pred_fallthru
      _
    %752 = vsyncpa [#allocation3], 1
    %753 = vsyncpa [#allocation5], 1

</llo_original>
